<compile_context>
chip_gen: v7x
topology: tpu7x:2x2x1
jax: 0.10.0
libtpu: 0.0.40
codegen_flags: <defaults>
</compile_context>

<pallas_src>
import math

import jax
import jax.numpy as jnp
from jax.experimental import pallas as pl
from jax.experimental.pallas import tpu as pltpu

# 48 MiB: > v5e's 16 MiB scoped default, < v7x's 64 MiB physical VMEM.
_VMEM_LIMIT_BYTES = 48 * 1024 * 1024
# Per-dim tile cap: with S <= 500 (max_len) and f32, each block stays ~1 MiB,
# so double-buffered in/out + accumulator is well under 16 MiB on every gen.
_TILE_CAP = 512

_PE_CACHE = {}


def _pe_table(max_len, d_model):
    """Sinusoidal PE buffer [max_len, d_model] (float32), cached across calls."""
    key = (max_len, d_model)
    if key not in _PE_CACHE:
        position = jnp.arange(max_len, dtype=jnp.float32)[:, None]        # (L, 1)
        div_term = jnp.exp(
            jnp.arange(0, d_model, 2, dtype=jnp.float32)
            * (-math.log(10000.0) / d_model)
        )                                                                  # (D/2,)
        angles = position * div_term                                       # (L, D/2)
        pe = jnp.zeros((max_len, d_model), jnp.float32)
        pe = pe.at[:, 0::2].set(jnp.sin(angles))
        pe = pe.at[:, 1::2].set(jnp.cos(angles))
        _PE_CACHE[key] = pe
    return _PE_CACHE[key]


def _pick_tile(dim, align, cap):
    """Largest t <= cap that divides dim and is a multiple of align; else full dim.

    Full-extent blocks are always legal under the (8,128) rule, so unaligned
    dims never produce ragged reduction tiles or oversized padded blocks.
    """
    if dim % align != 0:
        return dim
    t = (min(cap, dim) // align) * align
    while t >= align:
        if dim % t == 0:
            return t
        t -= align
    return dim


def _linear_pe_kernel(x_ref, w_ref, b_ref, pe_ref, o_ref, acc_ref):
    """out[b, s, n] = sum_k x[b, s, k] * w[k, n] + bias[n] + pe[s, n].

    Grid: (batch, seq-tiles, n-tiles, k-tiles); k (reduction) is innermost.
    x_ref: (1, tS, tK)   w_ref: (tK, tN)   b_ref: (1, tN)   pe_ref: (tS, tN)
    o_ref: (1, tS, tN)   acc_ref: (tS, tN) f32 scratch.
    """
    k = pl.program_id(3)

    @pl.when(k == 0)
    def _init():
        acc_ref[...] = jnp.zeros_like(acc_ref)

    acc_ref[...] += jnp.dot(
        x_ref[0], w_ref[...], preferred_element_type=jnp.float32
    )

    @pl.when(k == pl.num_programs(3) - 1)
    def _finalize():
        out = acc_ref[...] + b_ref[...].astype(jnp.float32) + pe_ref[...]
        o_ref[0] = out.astype(o_ref.dtype)


def input_proj_with_pe(x, w, b, *, max_len=500, tile_cap=_TILE_CAP):
    """Fused input_proj (Linear) + PositionalEncoding.

    x: [B, S, input_dim], w: [input_dim, d_model], b: [d_model]
    returns [B, S, d_model] = x @ w + b + pe[:S]
    """
    B, S, K = x.shape
    Kw, N = w.shape
    assert K == Kw, "weight inner dim must match input_dim"
    assert S <= max_len, "seq_len must be <= max_len"
    assert N % 2 == 0, "d_model must be even (matches the PyTorch module)"

    pe = _pe_table(max_len, N)[:S]          # (S, N), float32, cached
    b2 = b.reshape(1, N)

    tS = S                                   # full seq extent (<= max_len = 500)
    tK = _pick_tile(K, 128, tile_cap)
    tN = _pick_tile(N, 128, tile_cap)
    grid = (B, S // tS, N // tN, K // tK)

    itemsize = jnp.dtype(x.dtype).itemsize
    cost = pl.CostEstimate(
        flops=2 * B * S * K * N + 2 * B * S * N,
        transcendentals=0,
        bytes_accessed=(
            B * S * K * itemsize
            + K * N * jnp.dtype(w.dtype).itemsize
            + S * N * 4
            + B * S * N * itemsize
        ),
    )

    out = pl.pallas_call(
        _linear_pe_kernel,
        out_shape=jax.ShapeDtypeStruct((B, S, N), x.dtype),
        grid=grid,
        in_specs=[
            pl.BlockSpec((1, tS, tK), lambda bb, s, n, k: (bb, s, k)),   # x tile
            pl.BlockSpec((tK, tN),    lambda bb, s, n, k: (k, n)),       # w tile
            pl.BlockSpec((1, tN),     lambda bb, s, n, k: (0, n)),       # bias (resident over bb, s, k)
            pl.BlockSpec((tS, tN),    lambda bb, s, n, k: (s, n)),       # pe   (resident over bb, k)
        ],
        out_specs=pl.BlockSpec((1, tS, tN), lambda bb, s, n, k: (bb, s, n)),
        scratch_shapes=[pltpu.VMEM((tS, tN), jnp.float32)],
        compiler_params=pltpu.CompilerParams(
            dimension_semantics=("parallel", "parallel", "parallel", "arbitrary"),
            vmem_limit_bytes=_VMEM_LIMIT_BYTES,
        ),
        cost_estimate=cost,
    )(x, w, b2, pe)
    return out


def _reference(x, w, b):
    """Pure-JAX reference mirroring input_proj + PositionalEncoding (eval mode)."""
    B, S, K = x.shape
    N = w.shape[1]
    position = jnp.arange(S, dtype=jnp.float32)[:, None]
    div_term = jnp.exp(
        jnp.arange(0, N, 2, dtype=jnp.float32) * (-math.log(10000.0) / N)
    )
    pe = jnp.zeros((S, N), jnp.float32)
    pe = pe.at[:, 0::2].set(jnp.sin(position * div_term))
    pe = pe.at[:, 1::2].set(jnp.cos(position * div_term))
    y = jnp.einsum("bsk,kn->bsn", x, w, preferred_element_type=jnp.float32) + b
    return (y + pe[None]).astype(x.dtype)


if __name__ == "__main__":
    key = jax.random.PRNGKey(0)
    kx, kw, kb = jax.random.split(key, 3)

    # Small shapes consistent with the module's first two stages
    # (batch=2, seq=8, input_dim=48, d_model=32).
    B, S, input_dim, d_model = 2, 8, 48, 32
    x = jax.random.normal(kx, (B, S, input_dim), dtype=jnp.float32)
    w = jax.random.normal(kw, (input_dim, d_model), dtype=jnp.float32) * 0.02
    b = jax.random.normal(kb, (d_model,), dtype=jnp.float32) * 0.02

    out = jax.block_until_ready(input_proj_with_pe(x, w, b))
    ref = _reference(x, w, b)
    assert out.shape == ref.shape
    assert jnp.allclose(out, ref, atol=1e-3, rtol=1e-3), "mismatch vs reference (small)"

    # A second, 128-aligned shape that exercises the tiled K/N grid loop.
    B2, S2, K2, N2 = 2, 16, 256, 256
    x2 = jax.random.normal(kx, (B2, S2, K2), dtype=jnp.float32)
    w2 = jax.random.normal(kw, (K2, N2), dtype=jnp.float32) * 0.02
    b2 = jax.random.normal(kb, (N2,), dtype=jnp.float32) * 0.02

    out2 = jax.block_until_ready(input_proj_with_pe(x2, w2, b2, tile_cap=128))
    ref2 = _reference(x2, w2, b2)
    assert jnp.allclose(out2, ref2, atol=1e-3, rtol=1e-3), "mismatch vs reference (tiled)"

    print("KERNEL_OK")
</pallas_src>

<mosaic_0001>
module attributes {stable_mosaic.version = 11 : i64} {
  func.func @_linear_pe_kernel(%arg0: i32, %arg1: i32, %arg2: i32, %arg3: i32, %arg4: memref<1x8x48xf32, #tpu.memory_space<vmem>>, %arg5: memref<48x32xf32, #tpu.memory_space<vmem>>, %arg6: memref<1x32xf32, #tpu.memory_space<vmem>>, %arg7: memref<8x32xf32, #tpu.memory_space<vmem>>, %arg8: memref<1x8x32xf32, #tpu.memory_space<vmem>>, %arg9: memref<8x32xf32, #tpu.memory_space<vmem>>) attributes {dimension_semantics = [#tpu.dimension_semantics<parallel>, #tpu.dimension_semantics<parallel>, #tpu.dimension_semantics<parallel>, #tpu.dimension_semantics<arbitrary>], iteration_bounds = array<i64: 2, 1, 1, 1>, scalar_prefetch = 0 : i64, scratch_operands = 1 : i64, tpu.core_type = #tpu.core_type<tc>, window_params = [{transform_indices = @transform_0, window_bounds = array<i64: 1, 8, 48>}, {transform_indices = @transform_1, window_bounds = array<i64: 48, 32>}, {transform_indices = @transform_2, window_bounds = array<i64: 1, 32>}, {transform_indices = @transform_3, window_bounds = array<i64: 8, 32>}, {transform_indices = @transform_4, window_bounds = array<i64: 1, 8, 32>}]} {
    %c0_i32 = arith.constant 0 : i32
    %0 = arith.cmpi eq, %arg3, %c0_i32 : i32
    %1 = arith.extui %0 : i1 to i32
    %c0_i32_0 = arith.constant 0 : i32
    %2 = arith.cmpi ne, %1, %c0_i32_0 : i32
    scf.if %2 {
      %cst_11 = arith.constant 0.000000e+00 : f32
      %13 = vector.broadcast %cst_11 : f32 to vector<8x32xf32>
      %c0_12 = arith.constant 0 : index
      %c0_13 = arith.constant 0 : index
      %14 = vector.load %arg9[%c0_12, %c0_13] : memref<8x32xf32, #tpu.memory_space<vmem>>, vector<8x32xf32>
      tpu.vector_store %arg9[%c0_12, %c0_13], %13 {strides = array<i32>} : memref<8x32xf32, #tpu.memory_space<vmem>>, vector<8x32xf32>,
    } else {
    }
    %c0 = arith.constant 0 : index
    %c0_1 = arith.constant 0 : index
    %3 = vector.load %arg9[%c0, %c0_1] : memref<8x32xf32, #tpu.memory_space<vmem>>, vector<8x32xf32>
    %c0_2 = arith.constant 0 : index
    %c0_3 = arith.constant 0 : index
    %c0_4 = arith.constant 0 : index
    %4 = vector.load %arg4[%c0_2, %c0_3, %c0_4] : memref<1x8x48xf32, #tpu.memory_space<vmem>>, vector<1x8x48xf32>
    %5 = vector.shape_cast %4 : vector<1x8x48xf32> to vector<8x48xf32>
    %c0_5 = arith.constant 0 : index
    %c0_6 = arith.constant 0 : index
    %6 = vector.load %arg5[%c0_5, %c0_6] : memref<48x32xf32, #tpu.memory_space<vmem>>, vector<48x32xf32>
    %cst = arith.constant dense<0.000000e+00> : vector<8x32xf32>
    %7 = tpu.matmul %5, %6, %cst {dimension_numbers = #tpu.dot_dimension_numbers<[1], [0], [0], [1], [0, 0, 1, 1], [], []>} : vector<8x48xf32>, vector<48x32xf32>, vector<8x32xf32> -> vector<8x32xf32>
    %8 = arith.addf %3, %7 : vector<8x32xf32>
    %c0_7 = arith.constant 0 : index
    %c0_8 = arith.constant 0 : index
    %9 = vector.load %arg9[%c0_7, %c0_8] : memref<8x32xf32, #tpu.memory_space<vmem>>, vector<8x32xf32>
    tpu.vector_store %arg9[%c0_7, %c0_8], %8 {strides = array<i32>} : memref<8x32xf32, #tpu.memory_space<vmem>>, vector<8x32xf32>,
    %c0_i32_9 = arith.constant 0 : i32
    %10 = arith.cmpi eq, %arg3, %c0_i32_9 : i32
    %11 = arith.extui %10 : i1 to i32
    %c0_i32_10 = arith.constant 0 : i32
    %12 = arith.cmpi ne, %11, %c0_i32_10 : i32
    scf.if %12 {
      %c0_11 = arith.constant 0 : index
      %c0_12 = arith.constant 0 : index
      %13 = vector.load %arg9[%c0_11, %c0_12] : memref<8x32xf32, #tpu.memory_space<vmem>>, vector<8x32xf32>
      %c0_13 = arith.constant 0 : index
      %c0_14 = arith.constant 0 : index
      %14 = vector.load %arg6[%c0_13, %c0_14] : memref<1x32xf32, #tpu.memory_space<vmem>>, vector<1x32xf32>
      %15 = vector.broadcast %14 : vector<1x32xf32> to vector<8x32xf32>
      %16 = arith.addf %13, %15 : vector<8x32xf32>
      %c0_15 = arith.constant 0 : index
      %c0_16 = arith.constant 0 : index
      %17 = vector.load %arg7[%c0_15, %c0_16] : memref<8x32xf32, #tpu.memory_space<vmem>>, vector<8x32xf32>
      %18 = arith.addf %16, %17 : vector<8x32xf32>
      %c0_17 = arith.constant 0 : index
      %c0_18 = arith.constant 0 : index
      %c0_19 = arith.constant 0 : index
      %19 = vector.load %arg8[%c0_17, %c0_18, %c0_19] : memref<1x8x32xf32, #tpu.memory_space<vmem>>, vector<1x8x32xf32>
      %20 = vector.shape_cast %19 : vector<1x8x32xf32> to vector<8x32xf32>
      %21 = vector.shape_cast %18 : vector<8x32xf32> to vector<1x8x32xf32>
      tpu.vector_store %arg8[%c0_17, %c0_18, %c0_19], %21 {strides = array<i32>} : memref<1x8x32xf32, #tpu.memory_space<vmem>>, vector<1x8x32xf32>,
    } else {
    }
    return
  }
  func.func @transform_0(%arg0: i32, %arg1: i32, %arg2: i32, %arg3: i32) -> (i32, i32, i32) {
    %c0_i32 = arith.constant 0 : i32
    return %arg0, %arg1, %arg3 : i32, i32, i32
  }
  func.func @transform_1(%arg0: i32, %arg1: i32, %arg2: i32, %arg3: i32) -> (i32, i32) {
    %c0_i32 = arith.constant 0 : i32
    return %arg3, %arg2 : i32, i32
  }
  func.func @transform_2(%arg0: i32, %arg1: i32, %arg2: i32, %arg3: i32) -> (i32, i32) {
    %c0_i32 = arith.constant 0 : i32
    %c0_i32_0 = arith.constant 0 : i32
    return %c0_i32, %arg2 : i32, i32
  }
  func.func @transform_3(%arg0: i32, %arg1: i32, %arg2: i32, %arg3: i32) -> (i32, i32) {
    %c0_i32 = arith.constant 0 : i32
    return %arg1, %arg2 : i32, i32
  }
  func.func @transform_4(%arg0: i32, %arg1: i32, %arg2: i32, %arg3: i32) -> (i32, i32, i32) {
    %c0_i32 = arith.constant 0 : i32
    return %arg0, %arg1, %arg2 : i32, i32, i32
  }
}

</mosaic_0001>

<llo_original>
// kernel: tpu_custom_call.1
$region0: #{tpu_custom_call.1}
  #allocation0 [shape = 'u32[]', space=smem, size = 0x4, offset = 0x4, fixed_abs, tag = 'smem constant byte address 0x4 - core index']
  #allocation1 [shape = 'u32[144,128]{1,0:T(1,128)}', space=vmem, size = 0x12000, scoped, tag = 'internal scratch']
  #allocation2 [shape = 'f32[8,32]{1,0:T(8,128)}', space=vmem, size = 0x1000, scoped, tag = 'scratch operand']
  %s0 = inlined_call_operand.vmem [shape: f32[2,8,48], index: 0, kind: input, shape index: {}]
  %s1 = inlined_call_operand.vmem [shape: f32[48,32], index: 1, kind: input, shape index: {}]
  %s2 = inlined_call_operand.vmem [shape: f32[1,32], index: 2, kind: input, shape index: {}]
  %s3 = inlined_call_operand.vmem [shape: f32[8,32], index: 3, kind: input, shape index: {}]
  %s4 = inlined_call_operand.hbm [shape: f32[2,8,32], index: 4, kind: output, shape index: {}]
  %s5 = sld [smem:[#allocation0]]
  $region57: #{tpu_custom_call.1} parent=0
    _
  %s7 = ssub.s32 1, %s5
  %s8 = scalar_select 0, %s7, %s5
  $region1: #{tpu_custom_call.1} parent=0
    #allocation3 [shape = 'u8[8192]{0}', space=vmem, size = 0x2000, scoped, tag = 'output window, operand 0']
    #allocation4 [shape = 's32[2]{0}', space=sflag, size = 0x8, scoped, tag = 'scoped memory for tpu_custom_call.1']
    %9 = vsyncpa [#allocation4], 0
    %s10 = scalar_lea.sflag [#allocation4], 1
    %11 = vsyncpa %s10, 0
    loop: start=0, step=1, limit=4
    $region2: #{tpu_custom_call.1} parent=1 // loop_pre_header
      _
    $region3: #{tpu_custom_call.1} parent=1 // loop_header
      %s13 = sphi 0, %s17
      %p14 = scmp.ge.s32.totalorder %s13, 4
      %s20 = sphi 0, %s46
      %s21 = sphi 0, %s42
      %s22 = sphi 0, %s38
      %s23 = sphi 0, %s34
      %s24 = sphi 0, %s20
      %s25 = sphi 0, %s21
      %s26 = sphi 0, %s22
      %s27 = sphi 0, %s23
      %s28 = sphi 0, %s24
      %s29 = sphi 0, %s25
      %s30 = sphi 0, %s26
      %s31 = sphi 0, %s27
      %s53 = sphi 0, %s55
      %s56 = sphi 0, %s53
      %s57 = sphi 0, %s56
      %s73 = sphi 0, %s57
      %s81 = sphi 0, %s83
      %s84 = sphi 0, %s81
      %s85 = sphi 0, %s84
      %s101 = sphi 0, %s85
      %s107 = sphi 0, %s109
      %s110 = sphi 0, %s107
      %s111 = sphi 0, %s110
      %s127 = sphi 0, %s111
      %s135 = sphi 0, %s137
      %s138 = sphi 0, %s135
      %s139 = sphi 0, %s138
      %s155 = sphi 0, %s139
      %s165 = sphi 0, %s167
      %s168 = sphi 0, %s165
      %s169 = sphi 0, %s168
      %s185 = sphi 0, %s169
    $region4: #{tpu_custom_call.1} parent=1 // loop_header_branch
      %16 = sbr.rel (%p14) target = $region8
    $region5: #{tpu_custom_call.1} parent=1 // loop_body
      %s18 = ssub.s32 %s13, 1
      %s19 = ssub.s32 %s13, 2
      %s32 = sadd.s32 1, %s23
      %p33 = scmp.ge.s32.totalorder %s32, 1
      %s34 = scalar_select %p33, 0, %s32
      %s35 = sadd.s32 1, %s22
      %s36 = scalar_select %p33, %s35, %s22
      %p37 = scmp.ge.s32.totalorder %s36, 1
      %s38 = scalar_select %p37, 0, %s36
      %s39 = sadd.s32 1, %s21
      %s40 = scalar_select %p37, %s39, %s21
      %p41 = scmp.ge.s32.totalorder %s40, 1
      %s42 = scalar_select %p41, 0, %s40
      %s43 = sadd.s32 1, %s20
      %s44 = scalar_select %p41, %s43, %s20
      %p45 = scmp.ge.s32.totalorder %s44, 2
      %s46 = scalar_select %p45, 0, %s44
      %s47 = ssub.s32 %s20, %s46
      %s48 = ssub.s32 %s21, %s42
      %s49 = sor.u32 %s47, %s48
      %s50 = ssub.s32 %s23, %s34
      %s51 = sor.u32 %s49, %s50
      %p52 = scmp.eq.s32.totalorder %s51, 0
      %s54 = sadd.s32 %s53, 1
      %s55 = scalar_select %p52, %s53, %s54
      %p58 = pneg %p52
      %p59 = scmp.eq.s32.totalorder %s13, 1
      %p60 = por %p58, %p59
      %p61 = scmp.ne.s32.totalorder %s53, %s56
      %p62 = scmp.eq.s32.totalorder %s13, 0
      %p63 = por %p61, %p62
      %p64 = scmp.ne.s32.totalorder %s53, %s56
      %p65 = scmp.eq.s32.totalorder %s18, 1
      %p66 = por %p64, %p65
      %p67 = scmp.ne.s32.totalorder %s56, %s57
      %p68 = scmp.eq.s32.totalorder %s18, 0
      %p69 = por %p67, %p68
      %p70 = scmp.ne.s32.totalorder %s56, %s57
      %p71 = scmp.eq.s32.totalorder %s19, 1
      %p72 = por %p70, %p71
      %p74 = scmp.ne.s32.totalorder %s57, %s73
      %p75 = scmp.eq.s32.totalorder %s19, 0
      %p76 = por %p74, %p75
      %s77 = ssub.s32 %s23, %s34
      %s78 = ssub.s32 %s22, %s38
      %s79 = sor.u32 %s77, %s78
      %p80 = scmp.eq.s32.totalorder %s79, 0
      %s82 = sadd.s32 %s81, 1
      %s83 = scalar_select %p80, %s81, %s82
      %p86 = pneg %p80
      %p87 = scmp.eq.s32.totalorder %s13, 1
      %p88 = por %p86, %p87
      %p89 = scmp.ne.s32.totalorder %s81, %s84
      %p90 = scmp.eq.s32.totalorder %s13, 0
      %p91 = por %p89, %p90
      %p92 = scmp.ne.s32.totalorder %s81, %s84
      %p93 = scmp.eq.s32.totalorder %s18, 1
      %p94 = por %p92, %p93
      %p95 = scmp.ne.s32.totalorder %s84, %s85
      %p96 = scmp.eq.s32.totalorder %s18, 0
      %p97 = por %p95, %p96
      %p98 = scmp.ne.s32.totalorder %s84, %s85
      %p99 = scmp.eq.s32.totalorder %s19, 1
      %p100 = por %p98, %p99
      %p102 = scmp.ne.s32.totalorder %s85, %s101
      %p103 = scmp.eq.s32.totalorder %s19, 0
      %p104 = por %p102, %p103
      %s105 = ssub.s32 %s22, %s38
      %p106 = scmp.eq.s32.totalorder %s105, 0
      %s108 = sadd.s32 %s107, 1
      %s109 = scalar_select %p106, %s107, %s108
      %p112 = pneg %p106
      %p113 = scmp.eq.s32.totalorder %s13, 1
      %p114 = por %p112, %p113
      %p115 = scmp.ne.s32.totalorder %s107, %s110
      %p116 = scmp.eq.s32.totalorder %s13, 0
      %p117 = por %p115, %p116
      %p118 = scmp.ne.s32.totalorder %s107, %s110
      %p119 = scmp.eq.s32.totalorder %s18, 1
      %p120 = por %p118, %p119
      %p121 = scmp.ne.s32.totalorder %s110, %s111
      %p122 = scmp.eq.s32.totalorder %s18, 0
      %p123 = por %p121, %p122
      %p124 = scmp.ne.s32.totalorder %s110, %s111
      %p125 = scmp.eq.s32.totalorder %s19, 1
      %p126 = por %p124, %p125
      %p128 = scmp.ne.s32.totalorder %s111, %s127
      %p129 = scmp.eq.s32.totalorder %s19, 0
      %p130 = por %p128, %p129
      %s131 = ssub.s32 %s21, %s42
      %s132 = ssub.s32 %s22, %s38
      %s133 = sor.u32 %s131, %s132
      %p134 = scmp.eq.s32.totalorder %s133, 0
      %s136 = sadd.s32 %s135, 1
      %s137 = scalar_select %p134, %s135, %s136
      %p140 = pneg %p134
      %p141 = scmp.eq.s32.totalorder %s13, 1
      %p142 = por %p140, %p141
      %p143 = scmp.ne.s32.totalorder %s135, %s138
      %p144 = scmp.eq.s32.totalorder %s13, 0
      %p145 = por %p143, %p144
      %p146 = scmp.ne.s32.totalorder %s135, %s138
      %p147 = scmp.eq.s32.totalorder %s18, 1
      %p148 = por %p146, %p147
      %p149 = scmp.ne.s32.totalorder %s138, %s139
      %p150 = scmp.eq.s32.totalorder %s18, 0
      %p151 = por %p149, %p150
      %p152 = scmp.ne.s32.totalorder %s138, %s139
      %p153 = scmp.eq.s32.totalorder %s19, 1
      %p154 = por %p152, %p153
      %p156 = scmp.ne.s32.totalorder %s139, %s155
      %p157 = scmp.eq.s32.totalorder %s19, 0
      %p158 = por %p156, %p157
      %s159 = ssub.s32 %s20, %s46
      %s160 = ssub.s32 %s21, %s42
      %s161 = sor.u32 %s159, %s160
      %s162 = ssub.s32 %s22, %s38
      %s163 = sor.u32 %s161, %s162
      %p164 = scmp.eq.s32.totalorder %s163, 0
      %s166 = sadd.s32 %s165, 1
      %s167 = scalar_select %p164, %s165, %s166
      %p170 = pneg %p164
      %p171 = scmp.eq.s32.totalorder %s13, 1
      %p172 = por %p170, %p171
      %p173 = scmp.ne.s32.totalorder %s165, %s168
      %p174 = scmp.eq.s32.totalorder %s13, 0
      %p175 = por %p173, %p174
      %p176 = scmp.ne.s32.totalorder %s165, %s168
      %p177 = scmp.eq.s32.totalorder %s18, 1
      %p178 = por %p176, %p177
      %p179 = scmp.ne.s32.totalorder %s168, %s169
      %p180 = scmp.eq.s32.totalorder %s18, 0
      %p181 = por %p179, %p180
      %p182 = scmp.ne.s32.totalorder %s168, %s169
      %p183 = scmp.eq.s32.totalorder %s19, 1
      %p184 = por %p182, %p183
      %p186 = scmp.ne.s32.totalorder %s169, %s185
      %p187 = scmp.eq.s32.totalorder %s19, 0
      %p188 = por %p186, %p187
      %p189 = scmp.le.s32.totalorder 1, %s13
      %p190 = scmp.lt.s32.totalorder %s13, 3
      %p191 = pnand %p189, %p190
      %p192 = pneg %p191
      // Predicated region
      $region9: #{tpu_custom_call.1} parent=5 // pred_check
        _
      $region10: #{tpu_custom_call.1} parent=5 // pred_check_branch
        %194 = sbr.rel (%p191) target = $region12
      $region11: #{tpu_custom_call.1} parent=5 // pred_region
        %s195 = ssub.s32 %s13, 1
        // Predicated region
        $region13: #{tpu_custom_call.1} parent=11 // pred_check
          %p196 = pneg %p97
        $region14: #{tpu_custom_call.1} parent=11 // pred_check_branch
          %198 = sbr.rel (%p196) target = $region16
        $region15: #{tpu_custom_call.1} parent=11 // pred_region
          %s199 = smul.u32 6, %s27
          %p200 = scmp.lt.s32.totalorder %s199, 5
          %s201 = scalar_select %p200, %s199, 5
          %p202 = scmp.lt.s32.totalorder %s26, 0
          %s203 = scalar_select %p202, %s26, 0
          %s204 = sadd.s32 %s203, %s201
          %s205 = smul.addr %s204, 8
          %s206 = scalar_lea.vmem %s1, %s205
          %s207 = smul.u32 6, %s27
        $region16: #{tpu_custom_call.1} parent=11 // pred_fallthru
          _
        // Predicated region
        $region17: #{tpu_custom_call.1} parent=11 // pred_check
          %p208 = pneg %p123
        $region18: #{tpu_custom_call.1} parent=11 // pred_check_branch
          %210 = sbr.rel (%p208) target = $region20
        $region19: #{tpu_custom_call.1} parent=11 // pred_region
          %p211 = scmp.lt.s32.totalorder %s26, 0
          %s212 = scalar_select %p211, %s26, 0
          %s213 = scalar_lea.vmem %s2, %s212
        $region20: #{tpu_custom_call.1} parent=11 // pred_fallthru
          _
        // Predicated region
        $region21: #{tpu_custom_call.1} parent=11 // pred_check
          %p214 = pneg %p151
        $region22: #{tpu_custom_call.1} parent=11 // pred_check_branch
          %216 = sbr.rel (%p214) target = $region24
        $region23: #{tpu_custom_call.1} parent=11 // pred_region
          %p217 = scmp.lt.s32.totalorder %s25, 0
          %s218 = scalar_select %p217, %s25, 0
          %p219 = scmp.lt.s32.totalorder %s26, 0
          %s220 = scalar_select %p219, %s26, 0
          %s221 = sadd.s32 %s220, %s218
          %s222 = smul.addr %s221, 8
          %s223 = scalar_lea.vmem %s3, %s222
        $region24: #{tpu_custom_call.1} parent=11 // pred_fallthru
          _
      $region12: #{tpu_custom_call.1} parent=5 // pred_fallthru
        _
      %p224 = scmp.lt.s32.totalorder %s13, 2
      // Predicated region
      $region25: #{tpu_custom_call.1} parent=5 // pred_check
        %p225 = pneg %p224
      $region26: #{tpu_custom_call.1} parent=5 // pred_check_branch
        %227 = sbr.rel (%p225) target = $region28
      $region27: #{tpu_custom_call.1} parent=5 // pred_region
        // Predicated region
        $region29: #{tpu_custom_call.1} parent=27 // pred_check
          %p228 = pneg %p63
        $region30: #{tpu_custom_call.1} parent=27 // pred_check_branch
          %230 = sbr.rel (%p228) target = $region32
        $region31: #{tpu_custom_call.1} parent=27 // pred_region
          %p231 = scmp.lt.s32.totalorder %s20, 1
          %s232 = scalar_select %p231, %s20, 1
          %p233 = scmp.lt.s32.totalorder %s21, 0
          %s234 = scalar_select %p233, %s21, 0
          %p235 = scmp.lt.s32.totalorder %s23, 0
          %s236 = scalar_select %p235, %s23, 0
          %s237 = sadd.s32 %s236, %s234
          %s238 = sadd.s32 %s237, %s232
          %s239 = smul.addr %s238, 8
          %s240 = scalar_lea.vmem %s0, %s239
        $region32: #{tpu_custom_call.1} parent=27 // pred_fallthru
          _
      $region28: #{tpu_custom_call.1} parent=5 // pred_fallthru
        _
      %p241 = scmp.le.s32.totalorder 1, %s13
      %p242 = scmp.lt.s32.totalorder %s13, 3
      %p243 = pnand %p241, %p242
      %p244 = pneg %p243
      // Predicated region
      $region33: #{tpu_custom_call.1} parent=5 // pred_check
        _
      $region34: #{tpu_custom_call.1} parent=5 // pred_check_branch
        %246 = sbr.rel (%p243) target = $region36
      $region35: #{tpu_custom_call.1} parent=5 // pred_region
        %s247 = ssub.s32 %s13, 1
        %p248 = scmp.lt.s32.totalorder %s24, 1
        %s249 = scalar_select %p248, %s24, 1
        %p250 = scmp.lt.s32.totalorder %s25, 0
        %s251 = scalar_select %p250, %s25, 0
        %p252 = scmp.lt.s32.totalorder %s27, 0
        %s253 = scalar_select %p252, %s27, 0
        %s254 = sadd.s32 %s253, %s251
        %s255 = sadd.s32 %s254, %s249
        %s256 = smul.addr %s255, 8
        %s257 = scalar_lea.vmem %s0, %s256
        %p258 = pneg %p69
        %p259 = pneg %p66
        %s260 = smul.u32 6, %s27
        %p261 = scmp.lt.s32.totalorder %s260, 5
        %s262 = scalar_select %p261, %s260, 5
        %p263 = scmp.lt.s32.totalorder %s26, 0
        %s264 = scalar_select %p263, %s26, 0
        %s265 = sadd.s32 %s264, %s262
        %s266 = smul.addr %s265, 8
        %s267 = scalar_lea.vmem %s1, %s266
        %p268 = pneg %p97
        %p269 = pneg %p94
        %p270 = scmp.lt.s32.totalorder %s26, 0
        %s271 = scalar_select %p270, %s26, 0
        %s272 = scalar_lea.vmem %s2, %s271
        %p273 = pneg %p123
        %p274 = pneg %p120
        %p275 = scmp.lt.s32.totalorder %s25, 0
        %s276 = scalar_select %p275, %s25, 0
        %p277 = scmp.lt.s32.totalorder %s26, 0
        %s278 = scalar_select %p277, %s26, 0
        %s279 = sadd.s32 %s278, %s276
        %s280 = smul.addr %s279, 8
        %s281 = scalar_lea.vmem %s3, %s280
        %p282 = pneg %p151
        %p283 = pneg %p148
        %p284 = pneg %p181
        %p285 = pneg %p178
        %s286 = sand.u32 %s168, 1
        %s287 = scalar_lea.sflag [#allocation4], %s286
        %s288 = sand.u32 %s168, 1
        %s289 = smul.addr %s288, 8
        %s290 = scalar_lea.vmem [#allocation3], %s289
        %p291 = scmp.lt.s32.totalorder %s24, 1
        %s292 = scalar_select %p291, %s24, 1
        %p293 = scmp.lt.s32.totalorder %s25, 0
        %s294 = scalar_select %p293, %s25, 0
        %p295 = scmp.lt.s32.totalorder %s27, 0
        %s296 = scalar_select %p295, %s27, 0
        %s297 = sadd.s32 %s296, %s294
        %s298 = sadd.s32 %s297, %s292
        %s299 = smul.addr %s298, 8
        %s300 = scalar_lea.vmem %s0, %s299
        %s301 = smul.u32 6, %s27
        %p302 = scmp.lt.s32.totalorder %s301, 5
        %s303 = scalar_select %p302, %s301, 5
        %p304 = scmp.lt.s32.totalorder %s26, 0
        %s305 = scalar_select %p304, %s26, 0
        %s306 = sadd.s32 %s305, %s303
        %s307 = smul.addr %s306, 8
        %s308 = scalar_lea.vmem %s1, %s307
        %s309 = smul.u32 6, %s27
        %p310 = scmp.lt.s32.totalorder %s26, 0
        %s311 = scalar_select %p310, %s26, 0
        %s312 = scalar_lea.vmem %s2, %s311
        %p313 = scmp.lt.s32.totalorder %s25, 0
        %s314 = scalar_select %p313, %s25, 0
        %p315 = scmp.lt.s32.totalorder %s26, 0
        %s316 = scalar_select %p315, %s26, 0
        %s317 = sadd.s32 %s316, %s314
        %s318 = smul.addr %s317, 8
        %s319 = scalar_lea.vmem %s3, %s318
        %p320 = scmp.eq.s32.totalorder %s27, 0
        // Predicated region
        $region37: #{tpu_custom_call.1} parent=35 // pred_check
          %p321 = pneg %p320
        $region38: #{tpu_custom_call.1} parent=35 // pred_check_branch
          %323 = sbr.rel (%p321) target = $region40
        $region39: #{tpu_custom_call.1} parent=35 // pred_region
          %vm324 = vcmask 261120
          %325 = vst.msk [vmem:[#allocation2] sm:$0xff] %vm324, 0.0
        $region40: #{tpu_custom_call.1} parent=35 // pred_fallthru
          _
        %v326 = vld [vmem:[#allocation2] sm:$0xff]
        %v327 = vld [vmem:[%s300] sm:$0xff]
        %v328 = vld [vmem:[%s308] sm:$0xff]
        %v329 = vld [vmem:[%s308 + $0x8] sm:$0xff]
        %v330 = vld [vmem:[%s308 + $0x10] sm:$0xff]
        %v331 = vld [vmem:[%s308 + $0x18] sm:$0xff]
        %v332 = vld [vmem:[%s308 + $0x20] sm:$0xff]
        %v333 = vld [vmem:[%s308 + $0x28] sm:$0xff]
        %vm334 = vcmask 392192
        %v336 = vsel %vm334, %v327, 0
        %338 = vmatprep.subr.mxu0 0.0
        %339 = vmatpush1.msra.mxu0 %v328
        %340 = vmatprep.subr.mxu0 0.0
        %341 = vmatpush1.msra.mxu0 %v329
        %342 = vmatprep.subr.mxu0 0.0
        %343 = vmatpush1.msra.mxu0 %v330
        %344 = vmatprep.subr.mxu0 0.0
        %345 = vmatpush1.msra.mxu0 %v331
        %346 = vmatprep.subr.mxu0 0.0
        %347 = vmatpush1.msra.mxu0 %v332
        %348 = vmatprep.subr.mxu0 0.0
        %349 = vmatpush1.msra.mxu0 %v333
        %350 = vmatprep.subr.mxu0 0.0
        %351 = vmatpush1.msra.mxu0 0.0
        %352 = vmatprep.subr.mxu0 0.0
        %353 = vmatpush1.msra.mxu0 0.0
        %354 = vmatprep.subr.mxu0 0.0
        %355 = vmatpush1.msra.mxu0 0.0
        %356 = vmatprep.subr.mxu0 0.0
        %357 = vmatpush1.msra.mxu0 0.0
        %358 = vmatprep.subr.mxu0 0.0
        %359 = vmatpush1.msra.mxu0 0.0
        %360 = vmatprep.subr.mxu0 0.0
        %361 = vmatpush1.msra.mxu0 0.0
        %362 = vmatprep.subr.mxu0 0.0
        %363 = vmatpush1.msra.mxu0 0.0
        %364 = vmatprep.subr.mxu0 0.0
        %365 = vmatpush1.msra.mxu0 0.0
        %366 = vmatprep.subr.mxu0 0.0
        %367 = vmatpush1.msra.mxu0 0.0
        %368 = vmatprep.subr.mxu0 0.0
        %369 = vmatpush1.msra.mxu0 0.0
        %370 = vmatprep.subr.mxu0 0.0
        %371 = vmatpush1.msra.mxu0 0.0
        %372 = vmatprep.subr.mxu0 0.0
        %373 = vmatpush1.msra.mxu0 0.0
        %374 = vmatprep.subr.mxu0 0.0
        %375 = vmatpush1.msra.mxu0 0.0
        %376 = vmatprep.subr.mxu0 0.0
        %377 = vmatpush1.msra.mxu0 0.0
        %378 = vmatprep.subr.mxu0 0.0
        %379 = vmatpush1.msra.mxu0 0.0
        %380 = vmatprep.subr.mxu0 0.0
        %381 = vmatpush1.msra.mxu0 0.0
        %382 = vmatprep.subr.mxu0 0.0
        %383 = vmatpush1.msra.mxu0 0.0
        %384 = vmatprep.subr.mxu0 0.0
        %385 = vmatpush1.msra.mxu0 0.0
        %386 = vmatprep.subr.mxu0 0.0
        %387 = vmatpush1.msra.mxu0 0.0
        %388 = vmatprep.subr.mxu0 0.0
        %389 = vmatpush1.msra.mxu0 0.0
        %390 = vmatprep.subr.mxu0 0.0
        %391 = vmatpush1.msra.mxu0 0.0
        %392 = vmatprep.subr.mxu0 0.0
        %393 = vmatpush1.msra.mxu0 0.0
        %394 = vmatprep.subr.mxu0 0.0
        %395 = vmatpush1.msra.mxu0 0.0
        %396 = vmatprep.subr.mxu0 0.0
        %397 = vmatpush1.msra.mxu0 0.0
        %398 = vmatprep.subr.mxu0 0.0
        %399 = vmatpush1.msra.mxu0 0.0
        %400 = vmatprep.subr.mxu0 0.0
        %401 = vmatpush1.msra.mxu0 0.0
        %402 = vmatprep.mubr.f32.mxu0 0.0
        %403 = vmatmul.mubr.f32.gmra.mrb[0].mxu0 %v336
        %v404 = vpop.f32.mrb[0].mxu0
        %v405 = vadd.f32 0.0, %v404
        %v406 = vpop.f32.mrb[0].mxu0
        %407 = vdwg.mxu0
        %v408 = vadd.f32 %v326, %v405
        %vm409 = vcmask 261120
        %410 = vst.msk [vmem:[#allocation2] sm:$0xff] %vm409, %v408
        // Predicated region
        $region41: #{tpu_custom_call.1} parent=35 // pred_check
          %p411 = pneg %p320
        $region42: #{tpu_custom_call.1} parent=35 // pred_check_branch
          %413 = sbr.rel (%p411) target = $region44
        $region43: #{tpu_custom_call.1} parent=35 // pred_region
          %v414 = vld [vmem:[#allocation2] sm:$0xff]
          %v415 = vld [vmem:[%s312] sm:$0x1]
          %v417 = vlaneseq
          %v418 = vshrl.u32 %v417, 7
          %v419 = vsub.s32 0, %v418
          %v420 = vrot.slane %v415, %v419
          %v422 = vadd.f32 %v414, %v420
          %v423 = vld [vmem:[%s319] sm:$0xff]
          %v424 = vadd.f32 %v422, %v423
          %425 = vst.msk [vmem:[%s290] sm:$0xff] %vm409, %v424
        $region44: #{tpu_custom_call.1} parent=35 // pred_fallthru
          _
        %s426 = sand.u32 %s168, 1
        %s427 = scalar_lea.sflag [#allocation4], %s426
        %s428 = sand.u32 %s168, 1
        %s429 = smul.addr %s428, 8
        %s430 = scalar_lea.vmem [#allocation3], %s429
        // Predicated region
        $region45: #{tpu_custom_call.1} parent=35 // pred_check
          %p431 = pneg %p178
        $region46: #{tpu_custom_call.1} parent=35 // pred_check_branch
          %433 = sbr.rel (%p431) target = $region48
        $region47: #{tpu_custom_call.1} parent=35 // pred_region
          %s435 = ssub.s32 128, 128
          %436 = vsyncadd %s427, %s435
          %s437 = sadd.s32 %s26, %s25
          %s438 = sadd.s32 %s437, %s24
          %s439 = smul.addr %s438, 128
          %s440 = scalar_lea.hbm %s4, %s439
          %s442 = sshll.u32 %s430, 4
          %s443 = int_to_ptr.vmem [resolvable:$true] %s442
          %445 = dma.vmem_to_hbm [thread:$0]  %s443, 128, %s440, %s427
        $region48: #{tpu_custom_call.1} parent=35 // pred_fallthru
          _
      $region36: #{tpu_custom_call.1} parent=5 // pred_fallthru
        _
      %p446 = scmp.le.s32.totalorder 2, %s13
      // Predicated region
      $region49: #{tpu_custom_call.1} parent=5 // pred_check
        %p447 = pneg %p446
      $region50: #{tpu_custom_call.1} parent=5 // pred_check_branch
        %449 = sbr.rel (%p447) target = $region52
      $region51: #{tpu_custom_call.1} parent=5 // pred_region
        %s450 = ssub.s32 %s13, 2
        // Predicated region
        $region53: #{tpu_custom_call.1} parent=51 // pred_check
          %p451 = pneg %p184
        $region54: #{tpu_custom_call.1} parent=51 // pred_check_branch
          %453 = sbr.rel (%p451) target = $region56
        $region55: #{tpu_custom_call.1} parent=51 // pred_region
          %s454 = sand.u32 %s169, 1
          %s455 = scalar_lea.sflag [#allocation4], %s454
          %s456 = sand.u32 %s169, 1
          %s457 = smul.addr %s456, 8
          %s458 = scalar_lea.vmem [#allocation3], %s457
          %459 = dma.done %s455, 128
        $region56: #{tpu_custom_call.1} parent=51 // pred_fallthru
          _
      $region52: #{tpu_custom_call.1} parent=5 // pred_fallthru
        _
    $region6: #{tpu_custom_call.1} parent=1 // loop_footer
      %s17 = sadd.s32 1, %s13
    $region7: #{tpu_custom_call.1} parent=1 // loop_footer_branch
      %12 = sbr.rel target = $region3
    $region8: #{tpu_custom_call.1} parent=1 // loop_exit
      _
    %460 = vsyncpa [#allocation4], 1
    %s461 = scalar_lea.sflag [#allocation4], 1
    %462 = vsyncpa %s461, 1

</llo_original>
